<compile_context>
chip_gen: v6e
topology: v6e:2x2x1
jax: 0.10.0
libtpu: 0.0.40
codegen_flags: <defaults>
</compile_context>

<pallas_src>
import functools

import jax
import jax.numpy as jnp
from jax.experimental import pallas as pl
from jax.experimental.pallas import tpu as pltpu

TEMPERATURE = 3.0
ALPHA = 0.5
CLS_BALANCE = 1.0  # == 1  ->  the cls_criterion branch in the reference is skipped

_LOSS_SUBLANES = 8
_LOSS_LANES = 128


# --------------------------------------------------------------------------- #
# Fused kernel: streamed GAP + (student|teacher) head + selective KD + dense KD #
# --------------------------------------------------------------------------- #
def _fused_kd_kernel(x_ref, y_ref, w_ref, b_ref, s_out_ref, loss_ref, pooled_acc,
                     *, temperature, alpha, num_classes, batch_total, hw_total,
                     block_b, block_hw, mask_rows, mask_hw):
    h = pl.program_id(1)

    # ----- global average pool, streamed over the HW ("arbitrary") axis -----
    @pl.when(h == 0)
    def _():
        pooled_acc[...] = jnp.zeros_like(pooled_acc)

    x = x_ref[...].astype(jnp.float32)            # [TB, THW, C], channels-last
    if mask_hw:                                   # ragged HW edge block
        hw_ids = h * block_hw + jax.lax.broadcasted_iota(jnp.int32, x.shape, 1)
        x = jnp.where(hw_ids < hw_total, x, 0.0)
    pooled_acc[...] += jnp.sum(x, axis=1)         # weight is pre-scaled by 1/HW

    # ----- heads + losses: once per batch block (last HW step) --------------
    @pl.when(h == pl.num_programs(1) - 1)
    def _():
        T = jnp.float32(temperature)
        inv_T = jnp.float32(1.0 / temperature)
        K = num_classes

        logits = jnp.dot(pooled_acc[...], w_ref[...],
                         preferred_element_type=jnp.float32) + b_ref[...]  # [TB,2K]
        if mask_rows:                             # ragged batch edge block
            rows = (pl.program_id(0) * block_b
                    + jax.lax.broadcasted_iota(jnp.int32, (block_b, 1), 0))
            valid = rows < batch_total
            logits = jnp.where(valid, logits, 0.0)

        s = logits[:, :K]                         # student logits
        t = logits[:, K:]                         # teacher logits (no-grad net)
        s_out_ref[...] = s

        y = y_ref[...]
        pos = y > 0
        if mask_rows:
            pos = jnp.logical_and(pos, valid)
        neg = jnp.logical_not(pos)

        a = s * inv_T
        b = t * inv_T
        diff = b - a

        # ----- selective KD loss: O(B*K) decomposition ----------------------
        # For positive label j, the kept set is {negatives} U {j}.  With
        # per-sample negative sums A_s, A_t, C_t (max-stabilized):
        #   KL(j) = (C_t + e^{b_j}(b_j-a_j)) / (A_t + e^{b_j})
        #           + log(A_s + e^{a_j}) - log(A_t + e^{b_j})
        m_s = jnp.max(a, axis=-1, keepdims=True)
        m_t = jnp.max(b, axis=-1, keepdims=True)
        es = jnp.exp(a - m_s)
        et = jnp.exp(b - m_t)
        et_diff = et * diff
        a_s = jnp.sum(jnp.where(neg, es, 0.0), axis=-1, keepdims=True)
        a_t = jnp.sum(jnp.where(neg, et, 0.0), axis=-1, keepdims=True)
        c_t = jnp.sum(jnp.where(neg, et_diff, 0.0), axis=-1, keepdims=True)
        z_s = a_s + es
        z_t = a_t + et
        cross = (c_t + et_diff) / z_t             # exact divide on the loss path
        kl_j = (cross + (m_s + jnp.log(z_s)) - (m_t + jnp.log(z_t))) * (T * T)

        n_pos = jnp.sum(jnp.where(pos, 1.0, 0.0), axis=-1, keepdims=True)
        # TODO(synk): a sample with zero positive labels contributes 0 here;
        # the PyTorch reference would divide by zero for such a sample.
        per_sample = jnp.sum(jnp.where(pos, kl_j, 0.0), axis=-1, keepdims=True)
        per_sample = per_sample / jnp.maximum(n_pos, 1.0)
        select_kd = jnp.sum(per_sample)

        # ----- dense sigmoid KD (saturation-safe, shared exp(-|.|)) ----------
        #  kd_1 + kd_2 = sum softplus(a) - softplus(b) + sigmoid(b)*(b - a)
        ea = jnp.exp(-jnp.abs(a))
        eb = jnp.exp(-jnp.abs(b))
        sp_a = jnp.maximum(a, 0.0) + jnp.log(1.0 + ea)
        sp_b = jnp.maximum(b, 0.0) + jnp.log(1.0 + eb)
        sig_b = jnp.where(b >= 0.0, 1.0, eb) / (1.0 + eb)
        kd_sum = jnp.sum(sp_a - sp_b + sig_b * diff)
        kd_loss = kd_sum * (T * T) / jnp.float32(num_classes)

        # TODO(synk): cls_criterion branch (cls_balance < 1) uses an external
        # criterion that is not part of this module; default cls_balance == 1
        # skips it.
        loss_block = (select_kd * jnp.float32(alpha)
                      + kd_loss * jnp.float32(1.0 - alpha))

        # Lane-dense (8,128) store of this batch-block's partial loss.
        loss_ref[...] = jnp.full((1, _LOSS_SUBLANES, _LOSS_LANES), loss_block,
                                 dtype=jnp.float32)


# --------------------------------------------------------------------------- #
# Generation-aware tiling                                                      #
# --------------------------------------------------------------------------- #
def _round_down_mult(v, m):
    return max(m, (v // m) * m)


def _pick_tiling(B, HW, C, x_itemsize):
    try:
        vmem_capacity = int(pltpu.get_tpu_info().vmem_capacity_bytes)
    except Exception:
        vmem_capacity = 64 << 20                   # conservative (v7x per-TC)
    # ~VMEM/8 per x slab: ~8 MiB on v7x, ~16 MiB on v5e/v6e (double-buffered).
    target_block_bytes = max(1 << 20, vmem_capacity // 8)

    # Batch block: fill MXU rows; keep >= 2 blocks so the "parallel" grid axis
    # shards across v7x's two TensorCores whenever B allows.
    if B <= 8:
        block_b = B
    else:
        block_b = min(128, _round_down_mult(B, 8))
        if -(-B // block_b) < 2:
            block_b = _round_down_mult(max(8, (B + 1) // 2), 8)
        while block_b > 8 and block_b * min(HW, 8) * C * x_itemsize > target_block_bytes:
            block_b = _round_down_mult(block_b // 2, 8)
    num_b_blocks = -(-B // block_b)

    # HW block: largest multiple of 8 whose x slab stays in the sweet spot.
    max_hw = max(1, target_block_bytes // max(1, block_b * C * x_itemsize))
    if max_hw >= HW:
        block_hw = HW
    else:
        block_hw = _round_down_mult(min(max_hw, HW), 8)
    num_hw_blocks = -(-HW // block_hw)

    return block_b, num_b_blocks, block_hw, num_hw_blocks, vmem_capacity


# --------------------------------------------------------------------------- #
# Wrapper                                                                      #
# --------------------------------------------------------------------------- #
def ml_selective_kd_forward(x, target, params, *, temperature=TEMPERATURE,
                            alpha=ALPHA, block_b=None, block_hw=None,
                            cast_x_to_bf16=True):
    B, C, H, W = x.shape
    K = params["s_w"].shape[1]
    HW = H * W

    # Activations dominate HBM traffic on every generation; bf16 halves the
    # bytes (the kernel still pools / accumulates in f32).
    if cast_x_to_bf16 and x.dtype == jnp.float32:
        x = x.astype(jnp.bfloat16)
    x_itemsize = jnp.dtype(x.dtype).itemsize

    # Channels-last so C (typically a multiple of 128) is the lane axis, the
    # GAP is a cheap second-minor reduction, and pooled [TB, C] is lane-dense
    # into the MXU.
    x_cl = jnp.transpose(x, (0, 2, 3, 1)).reshape(B, HW, C)

    bb, num_b_blocks, bhw, num_hw_blocks, vmem_capacity = _pick_tiling(
        B, HW, C, x_itemsize)
    if block_b is not None:
        bb = min(int(block_b), B)
        num_b_blocks = -(-B // bb)
    if block_hw is not None:
        bhw = min(int(block_hw), HW)
        num_hw_blocks = -(-HW // bhw)
    mask_rows = (B % bb) != 0
    mask_hw = (HW % bhw) != 0

    # One fused head: columns [0, K) student, [K, 2K) teacher; pre-scaled by
    # 1/HW so the kernel pools with a plain sum.
    w = (jnp.concatenate([params["s_w"], params["t_w"]], axis=1)
         * jnp.float32(1.0 / HW))                                   # [C, 2K]
    bias = jnp.concatenate([params["s_b"], params["t_b"]], axis=1)  # [1, 2K]

    kernel = functools.partial(
        _fused_kd_kernel, temperature=float(temperature), alpha=float(alpha),
        num_classes=K, batch_total=B, hw_total=HW, block_b=bb, block_hw=bhw,
        mask_rows=mask_rows, mask_hw=mask_hw)

    # Explicit VMEM budget (double-buffered x/target/w/outputs + pooled scratch),
    # clamped to 3/4 of physical capacity so it is valid on v5e/v6e/v7x.
    tgt_itemsize = jnp.dtype(target.dtype).itemsize
    x_blk = bb * bhw * C * x_itemsize
    tgt_blk = bb * K * tgt_itemsize
    w_blk = C * 2 * K * 4 + 2 * K * 4
    out_blk = bb * K * 4 + _LOSS_SUBLANES * _LOSS_LANES * 4
    needed = 2 * (x_blk + tgt_blk + w_blk + out_blk) + bb * C * 4 + (2 << 20)
    vmem_limit = int(min(vmem_capacity * 3 // 4, max(needed, 32 << 20)))

    cost = pl.CostEstimate(
        flops=int(2 * B * C * HW + 2 * B * C * 2 * K + 64 * B * K),
        transcendentals=int(7 * B * K),
        bytes_accessed=int(B * HW * C * x_itemsize
                           + B * K * (tgt_itemsize + 4)
                           + C * 2 * K * 4
                           + num_b_blocks * _LOSS_SUBLANES * _LOSS_LANES * 4),
    )

    s_out, loss_parts = pl.pallas_call(
        kernel,
        grid=(num_b_blocks, num_hw_blocks),
        in_specs=[
            pl.BlockSpec((bb, bhw, C), lambda i, h: (i, h, 0)),
            pl.BlockSpec((bb, K), lambda i, h: (i, 0)),
            pl.BlockSpec((C, 2 * K), lambda i, h: (0, 0)),
            pl.BlockSpec((1, 2 * K), lambda i, h: (0, 0)),
        ],
        out_specs=[
            pl.BlockSpec((bb, K), lambda i, h: (i, 0)),
            pl.BlockSpec((1, _LOSS_SUBLANES, _LOSS_LANES), lambda i, h: (i, 0, 0)),
        ],
        out_shape=[
            jax.ShapeDtypeStruct((B, K), jnp.float32),
            jax.ShapeDtypeStruct((num_b_blocks, _LOSS_SUBLANES, _LOSS_LANES),
                                 jnp.float32),
        ],
        scratch_shapes=[pltpu.VMEM((bb, C), jnp.float32)],
        compiler_params=pltpu.CompilerParams(
            dimension_semantics=("parallel", "arbitrary"),
            vmem_limit_bytes=vmem_limit),
        cost_estimate=cost,
    )(x_cl, target, w, bias)

    # loss vector of length B with only loss[0] set (as in the reference).
    # Both KD terms are 'sum' reductions over samples, so summing the per-block
    # partials is exact (no 1/B factor in the reference).
    loss0 = jnp.sum(loss_parts[:, 0, 0])
    loss = jnp.zeros((B,), jnp.float32).at[0].set(loss0)
    return s_out, loss


if __name__ == "__main__":
    B, C, H, W, K = 2, 4, 16, 16, 16  # num_classes = 16

    key = jax.random.PRNGKey(0)
    kx, ksw, ksb, ktw, ktb, kt = jax.random.split(key, 6)

    x = jax.random.normal(kx, (B, C, H, W), jnp.float32)
    params = {
        "s_w": 0.1 * jax.random.normal(ksw, (C, K), jnp.float32),
        "s_b": 0.1 * jax.random.normal(ksb, (1, K), jnp.float32),
        "t_w": 0.1 * jax.random.normal(ktw, (C, K), jnp.float32),
        "t_b": 0.1 * jax.random.normal(ktb, (1, K), jnp.float32),
    }
    # multi-hot integer targets, every sample has at least one positive label
    target = (jax.random.uniform(kt, (B, K)) < 0.3).astype(jnp.int32)
    target = target.at[:, 0].set(1)

    s_out, loss = ml_selective_kd_forward(x, target, params)
    jax.block_until_ready((s_out, loss))
    print("KERNEL_OK")
</pallas_src>

<mosaic_0001>
module attributes {stable_mosaic.version = 11 : i64} {
  func.func @_fused_kd_kernel(%arg0: i32, %arg1: i32, %arg2: memref<2x256x4xbf16, #tpu.memory_space<vmem>>, %arg3: memref<2x16xi32, #tpu.memory_space<vmem>>, %arg4: memref<4x32xf32, #tpu.memory_space<vmem>>, %arg5: memref<1x32xf32, #tpu.memory_space<vmem>>, %arg6: memref<2x16xf32, #tpu.memory_space<vmem>>, %arg7: memref<1x8x128xf32, #tpu.memory_space<vmem>>, %arg8: memref<2x4xf32, #tpu.memory_space<vmem>>) attributes {dimension_semantics = [#tpu.dimension_semantics<parallel>, #tpu.dimension_semantics<arbitrary>], iteration_bounds = array<i64: 1, 1>, scalar_prefetch = 0 : i64, scratch_operands = 1 : i64, tpu.core_type = #tpu.core_type<tc>, window_params = [{transform_indices = @transform_0, window_bounds = array<i64: 2, 256, 4>}, {transform_indices = @transform_1, window_bounds = array<i64: 2, 16>}, {pipeline_mode = #tpu.pipeline_mode<synchronous>, transform_indices = @transform_2, window_bounds = array<i64: 4, 32>}, {pipeline_mode = #tpu.pipeline_mode<synchronous>, transform_indices = @transform_3, window_bounds = array<i64: 1, 32>}, {transform_indices = @transform_4, window_bounds = array<i64: 2, 16>}, {transform_indices = @transform_5, window_bounds = array<i64: 1, 8, 128>}]} {
    %c0_i32 = arith.constant 0 : i32
    %0 = arith.cmpi eq, %arg1, %c0_i32 : i32
    %1 = arith.extui %0 : i1 to i32
    %c0_i32_0 = arith.constant 0 : i32
    %2 = arith.cmpi ne, %1, %c0_i32_0 : i32
    scf.if %2 {
      %cst_9 = arith.constant 0.000000e+00 : f32
      %12 = vector.broadcast %cst_9 : f32 to vector<2x4xf32>
      %c0_10 = arith.constant 0 : index
      %c0_11 = arith.constant 0 : index
      %13 = vector.load %arg8[%c0_10, %c0_11] : memref<2x4xf32, #tpu.memory_space<vmem>>, vector<2x4xf32>
      tpu.vector_store %arg8[%c0_10, %c0_11], %12 {strides = array<i32>} : memref<2x4xf32, #tpu.memory_space<vmem>>, vector<2x4xf32>,
    } else {
    }
    %c0 = arith.constant 0 : index
    %c0_1 = arith.constant 0 : index
    %c0_2 = arith.constant 0 : index
    %3 = vector.load %arg2[%c0, %c0_1, %c0_2] : memref<2x256x4xbf16, #tpu.memory_space<vmem>>, vector<2x256x4xbf16>
    %4 = arith.extf %3 : vector<2x256x4xbf16> to vector<2x256x4xf32>
    %c0_3 = arith.constant 0 : index
    %c0_4 = arith.constant 0 : index
    %5 = vector.load %arg8[%c0_3, %c0_4] : memref<2x4xf32, #tpu.memory_space<vmem>>, vector<2x4xf32>
    %cst = arith.constant dense<0.000000e+00> : vector<2x4xf32>
    %6 = vector.multi_reduction <add>, %4, %cst [1] : vector<2x256x4xf32> to vector<2x4xf32>
    %7 = arith.addf %5, %6 : vector<2x4xf32>
    %c0_5 = arith.constant 0 : index
    %c0_6 = arith.constant 0 : index
    %8 = vector.load %arg8[%c0_5, %c0_6] : memref<2x4xf32, #tpu.memory_space<vmem>>, vector<2x4xf32>
    tpu.vector_store %arg8[%c0_5, %c0_6], %7 {strides = array<i32>} : memref<2x4xf32, #tpu.memory_space<vmem>>, vector<2x4xf32>,
    %c0_i32_7 = arith.constant 0 : i32
    %9 = arith.cmpi eq, %arg1, %c0_i32_7 : i32
    %10 = arith.extui %9 : i1 to i32
    %c0_i32_8 = arith.constant 0 : i32
    %11 = arith.cmpi ne, %10, %c0_i32_8 : i32
    scf.if %11 {
      %c0_9 = arith.constant 0 : index
      %c0_10 = arith.constant 0 : index
      %12 = vector.load %arg8[%c0_9, %c0_10] : memref<2x4xf32, #tpu.memory_space<vmem>>, vector<2x4xf32>
      %c0_11 = arith.constant 0 : index
      %c0_12 = arith.constant 0 : index
      %13 = vector.load %arg4[%c0_11, %c0_12] : memref<4x32xf32, #tpu.memory_space<vmem>>, vector<4x32xf32>
      %cst_13 = arith.constant dense<0.000000e+00> : vector<2x32xf32>
      %14 = tpu.matmul %12, %13, %cst_13 {dimension_numbers = #tpu.dot_dimension_numbers<[1], [0], [0], [1], [0, 0, 1, 1], [], []>} : vector<2x4xf32>, vector<4x32xf32>, vector<2x32xf32> -> vector<2x32xf32>
      %c0_14 = arith.constant 0 : index
      %c0_15 = arith.constant 0 : index
      %15 = vector.load %arg5[%c0_14, %c0_15] : memref<1x32xf32, #tpu.memory_space<vmem>>, vector<1x32xf32>
      %16 = vector.broadcast %15 : vector<1x32xf32> to vector<2x32xf32>
      %17 = arith.addf %14, %16 : vector<2x32xf32>
      %18 = vector.extract_strided_slice %17 {offsets = [0, 0], sizes = [2, 16], strides = [1, 1]} : vector<2x32xf32> to vector<2x16xf32>
      %19 = vector.extract_strided_slice %17 {offsets = [0, 16], sizes = [2, 16], strides = [1, 1]} : vector<2x32xf32> to vector<2x16xf32>
      %c0_16 = arith.constant 0 : index
      %c0_17 = arith.constant 0 : index
      %20 = vector.load %arg6[%c0_16, %c0_17] : memref<2x16xf32, #tpu.memory_space<vmem>>, vector<2x16xf32>
      tpu.vector_store %arg6[%c0_16, %c0_17], %18 {strides = array<i32>} : memref<2x16xf32, #tpu.memory_space<vmem>>, vector<2x16xf32>,
      %c0_18 = arith.constant 0 : index
      %c0_19 = arith.constant 0 : index
      %21 = vector.load %arg3[%c0_18, %c0_19] : memref<2x16xi32, #tpu.memory_space<vmem>>, vector<2x16xi32>
      %c0_i32_20 = arith.constant 0 : i32
      %22 = vector.broadcast %c0_i32_20 : i32 to vector<2x16xi32>
      %23 = arith.cmpi sgt, %21, %22 : vector<2x16xi32>
      %cst_21 = arith.constant dense<true> : vector<2x16xi1>
      %24 = arith.xori %23, %cst_21 : vector<2x16xi1>
      %cst_22 = arith.constant 0.333333343 : f32
      %25 = vector.broadcast %cst_22 : f32 to vector<2x16xf32>
      %26 = arith.mulf %18, %25 : vector<2x16xf32>
      %cst_23 = arith.constant 0.333333343 : f32
      %27 = vector.broadcast %cst_23 : f32 to vector<2x16xf32>
      %28 = arith.mulf %19, %27 : vector<2x16xf32>
      %29 = arith.subf %28, %26 : vector<2x16xf32>
      %cst_24 = arith.constant dense<0xFF800000> : vector<2xf32>
      %30 = vector.multi_reduction <maximumf>, %26, %cst_24 [1] : vector<2x16xf32> to vector<2xf32>
      %31 = vector.shape_cast %30 : vector<2xf32> to vector<2x1xf32>
      %cst_25 = arith.constant dense<0xFF800000> : vector<2xf32>
      %32 = vector.multi_reduction <maximumf>, %28, %cst_25 [1] : vector<2x16xf32> to vector<2xf32>
      %33 = vector.shape_cast %32 : vector<2xf32> to vector<2x1xf32>
      %34 = vector.broadcast %31 : vector<2x1xf32> to vector<2x16xf32>
      %35 = arith.subf %26, %34 : vector<2x16xf32>
      %36 = math.exp %35 : vector<2x16xf32>
      %37 = vector.broadcast %33 : vector<2x1xf32> to vector<2x16xf32>
      %38 = arith.subf %28, %37 : vector<2x16xf32>
      %39 = math.exp %38 : vector<2x16xf32>
      %40 = arith.mulf %39, %29 : vector<2x16xf32>
      %cst_26 = arith.constant 0.000000e+00 : f32
      %41 = vector.broadcast %cst_26 : f32 to vector<2x16xf32>
      %42 = arith.select %24, %36, %41 : vector<2x16xi1>, vector<2x16xf32>
      %cst_27 = arith.constant dense<0.000000e+00> : vector<2xf32>
      %43 = vector.multi_reduction <add>, %42, %cst_27 [1] : vector<2x16xf32> to vector<2xf32>
      %44 = vector.shape_cast %43 : vector<2xf32> to vector<2x1xf32>
      %cst_28 = arith.constant 0.000000e+00 : f32
      %45 = vector.broadcast %cst_28 : f32 to vector<2x16xf32>
      %46 = arith.select %24, %39, %45 : vector<2x16xi1>, vector<2x16xf32>
      %cst_29 = arith.constant dense<0.000000e+00> : vector<2xf32>
      %47 = vector.multi_reduction <add>, %46, %cst_29 [1] : vector<2x16xf32> to vector<2xf32>
      %48 = vector.shape_cast %47 : vector<2xf32> to vector<2x1xf32>
      %cst_30 = arith.constant 0.000000e+00 : f32
      %49 = vector.broadcast %cst_30 : f32 to vector<2x16xf32>
      %50 = arith.select %24, %40, %49 : vector<2x16xi1>, vector<2x16xf32>
      %cst_31 = arith.constant dense<0.000000e+00> : vector<2xf32>
      %51 = vector.multi_reduction <add>, %50, %cst_31 [1] : vector<2x16xf32> to vector<2xf32>
      %52 = vector.shape_cast %51 : vector<2xf32> to vector<2x1xf32>
      %53 = vector.broadcast %44 : vector<2x1xf32> to vector<2x16xf32>
      %54 = arith.addf %53, %36 : vector<2x16xf32>
      %55 = vector.broadcast %48 : vector<2x1xf32> to vector<2x16xf32>
      %56 = arith.addf %55, %39 : vector<2x16xf32>
      %57 = vector.broadcast %52 : vector<2x1xf32> to vector<2x16xf32>
      %58 = arith.addf %57, %40 : vector<2x16xf32>
      %59 = arith.divf %58, %56 : vector<2x16xf32>
      %60 = math.log %54 : vector<2x16xf32>
      %61 = vector.broadcast %31 : vector<2x1xf32> to vector<2x16xf32>
      %62 = arith.addf %61, %60 : vector<2x16xf32>
      %63 = arith.addf %59, %62 : vector<2x16xf32>
      %64 = math.log %56 : vector<2x16xf32>
      %65 = vector.broadcast %33 : vector<2x1xf32> to vector<2x16xf32>
      %66 = arith.addf %65, %64 : vector<2x16xf32>
      %67 = arith.subf %63, %66 : vector<2x16xf32>
      %cst_32 = arith.constant 3.000000e+00 : f32
      %cst_33 = arith.constant 3.000000e+00 : f32
      %68 = arith.mulf %cst_32, %cst_33 : f32
      %69 = vector.broadcast %68 : f32 to vector<2x16xf32>
      %70 = arith.mulf %67, %69 : vector<2x16xf32>
      %cst_34 = arith.constant 1.000000e+00 : f32
      %cst_35 = arith.constant 0.000000e+00 : f32
      %71 = vector.broadcast %cst_34 : f32 to vector<2x16xf32>
      %72 = vector.broadcast %cst_35 : f32 to vector<2x16xf32>
      %73 = arith.select %23, %71, %72 : vector<2x16xi1>, vector<2x16xf32>
      %cst_36 = arith.constant dense<0.000000e+00> : vector<2xf32>
      %74 = vector.multi_reduction <add>, %73, %cst_36 [1] : vector<2x16xf32> to vector<2xf32>
      %75 = vector.shape_cast %74 : vector<2xf32> to vector<2x1xf32>
      %cst_37 = arith.constant 0.000000e+00 : f32
      %76 = vector.broadcast %cst_37 : f32 to vector<2x16xf32>
      %77 = arith.select %23, %70, %76 : vector<2x16xi1>, vector<2x16xf32>
      %cst_38 = arith.constant dense<0.000000e+00> : vector<2xf32>
      %78 = vector.multi_reduction <add>, %77, %cst_38 [1] : vector<2x16xf32> to vector<2xf32>
      %79 = vector.shape_cast %78 : vector<2xf32> to vector<2x1xf32>
      %cst_39 = arith.constant 1.000000e+00 : f32
      %80 = vector.broadcast %cst_39 : f32 to vector<2x1xf32>
      %81 = arith.maximumf %75, %80 : vector<2x1xf32>
      %82 = arith.divf %79, %81 : vector<2x1xf32>
      %83 = vector.shape_cast %82 : vector<2x1xf32> to vector<1x2x1xf32>
      %cst_40 = arith.constant dense<0.000000e+00> : vector<1xf32>
      %84 = vector.multi_reduction <add>, %83, %cst_40 [1, 2] : vector<1x2x1xf32> to vector<1xf32>
      %85 = vector.shape_cast %84 : vector<1xf32> to vector<1x1x1xf32>
      %86 = vector.extract %85[0, 0, 0] : f32 from vector<1x1x1xf32>
      %87 = math.absf %26 : vector<2x16xf32>
      %cst_41 = arith.constant 0.000000e+00 : f32
      %88 = vector.broadcast %cst_41 : f32 to vector<2x16xf32>
      %89 = arith.subf %88, %87 : vector<2x16xf32>
      %90 = math.exp %89 : vector<2x16xf32>
      %91 = math.absf %28 : vector<2x16xf32>
      %cst_42 = arith.constant 0.000000e+00 : f32
      %92 = vector.broadcast %cst_42 : f32 to vector<2x16xf32>
      %93 = arith.subf %92, %91 : vector<2x16xf32>
      %94 = math.exp %93 : vector<2x16xf32>
      %cst_43 = arith.constant 0.000000e+00 : f32
      %95 = vector.broadcast %cst_43 : f32 to vector<2x16xf32>
      %96 = arith.maximumf %26, %95 : vector<2x16xf32>
      %cst_44 = arith.constant 1.000000e+00 : f32
      %97 = vector.broadcast %cst_44 : f32 to vector<2x16xf32>
      %98 = arith.addf %97, %90 : vector<2x16xf32>
      %99 = math.log %98 : vector<2x16xf32>
      %100 = arith.addf %96, %99 : vector<2x16xf32>
      %cst_45 = arith.constant 0.000000e+00 : f32
      %101 = vector.broadcast %cst_45 : f32 to vector<2x16xf32>
      %102 = arith.maximumf %28, %101 : vector<2x16xf32>
      %cst_46 = arith.constant 1.000000e+00 : f32
      %103 = vector.broadcast %cst_46 : f32 to vector<2x16xf32>
      %104 = arith.addf %103, %94 : vector<2x16xf32>
      %105 = math.log %104 : vector<2x16xf32>
      %106 = arith.addf %102, %105 : vector<2x16xf32>
      %cst_47 = arith.constant 0.000000e+00 : f32
      %107 = vector.broadcast %cst_47 : f32 to vector<2x16xf32>
      %108 = arith.cmpf oge, %28, %107 : vector<2x16xf32>
      %cst_48 = arith.constant 1.000000e+00 : f32
      %109 = vector.broadcast %cst_48 : f32 to vector<2x16xf32>
      %110 = arith.select %108, %109, %94 : vector<2x16xi1>, vector<2x16xf32>
      %cst_49 = arith.constant 1.000000e+00 : f32
      %111 = vector.broadcast %cst_49 : f32 to vector<2x16xf32>
      %112 = arith.addf %111, %94 : vector<2x16xf32>
      %113 = arith.divf %110, %112 : vector<2x16xf32>
      %114 = arith.subf %100, %106 : vector<2x16xf32>
      %115 = arith.mulf %113, %29 : vector<2x16xf32>
      %116 = arith.addf %114, %115 : vector<2x16xf32>
      %117 = vector.shape_cast %116 : vector<2x16xf32> to vector<1x2x16xf32>
      %cst_50 = arith.constant dense<0.000000e+00> : vector<1xf32>
      %118 = vector.multi_reduction <add>, %117, %cst_50 [1, 2] : vector<1x2x16xf32> to vector<1xf32>
      %119 = vector.shape_cast %118 : vector<1xf32> to vector<1x1x1xf32>
      %120 = vector.extract %119[0, 0, 0] : f32 from vector<1x1x1xf32>
      %cst_51 = arith.constant 3.000000e+00 : f32
      %cst_52 = arith.constant 3.000000e+00 : f32
      %121 = arith.mulf %cst_51, %cst_52 : f32
      %122 = arith.mulf %120, %121 : f32
      %cst_53 = arith.constant 1.600000e+01 : f32
      %123 = arith.divf %122, %cst_53 : f32
      %cst_54 = arith.constant 5.000000e-01 : f32
      %124 = arith.mulf %86, %cst_54 : f32
      %cst_55 = arith.constant 5.000000e-01 : f32
      %125 = arith.mulf %123, %cst_55 : f32
      %126 = arith.addf %124, %125 : f32
      %127 = vector.broadcast %126 : f32 to vector<1x8x128xf32>
      %c0_56 = arith.constant 0 : index
      %c0_57 = arith.constant 0 : index
      %c0_58 = arith.constant 0 : index
      %128 = vector.load %arg7[%c0_56, %c0_57, %c0_58] : memref<1x8x128xf32, #tpu.memory_space<vmem>>, vector<1x8x128xf32>
      tpu.vector_store %arg7[%c0_56, %c0_57, %c0_58], %127 {strides = array<i32>} : memref<1x8x128xf32, #tpu.memory_space<vmem>>, vector<1x8x128xf32>,
    } else {
    }
    return
  }
  func.func @transform_0(%arg0: i32, %arg1: i32) -> (i32, i32, i32) {
    %c0_i32 = arith.constant 0 : i32
    %c0_i32_0 = arith.constant 0 : i32
    return %arg0, %arg1, %c0_i32 : i32, i32, i32
  }
  func.func @transform_1(%arg0: i32, %arg1: i32) -> (i32, i32) {
    %c0_i32 = arith.constant 0 : i32
    %c0_i32_0 = arith.constant 0 : i32
    return %arg0, %c0_i32 : i32, i32
  }
  func.func @transform_2(%arg0: i32, %arg1: i32) -> (i32, i32) {
    %c0_i32 = arith.constant 0 : i32
    %c0_i32_0 = arith.constant 0 : i32
    %c0_i32_1 = arith.constant 0 : i32
    return %c0_i32, %c0_i32_0 : i32, i32
  }
  func.func @transform_3(%arg0: i32, %arg1: i32) -> (i32, i32) {
    %c0_i32 = arith.constant 0 : i32
    %c0_i32_0 = arith.constant 0 : i32
    %c0_i32_1 = arith.constant 0 : i32
    return %c0_i32, %c0_i32_0 : i32, i32
  }
  func.func @transform_4(%arg0: i32, %arg1: i32) -> (i32, i32) {
    %c0_i32 = arith.constant 0 : i32
    %c0_i32_0 = arith.constant 0 : i32
    return %arg0, %c0_i32 : i32, i32
  }
  func.func @transform_5(%arg0: i32, %arg1: i32) -> (i32, i32, i32) {
    %c0_i32 = arith.constant 0 : i32
    %c0_i32_0 = arith.constant 0 : i32
    %c0_i32_1 = arith.constant 0 : i32
    return %arg0, %c0_i32, %c0_i32_0 : i32, i32, i32
  }
}

</mosaic_0001>

<llo_original>
// kernel: tpu_custom_call.1
$region0: #{tpu_custom_call.1}
  #allocation0 [shape = 'u32[]', space=smem, size = 0x4, offset = 0x4, fixed_abs, tag = 'smem constant byte address 0x4 - core index']
  #allocation1 [shape = 'u32[144,128]{1,0:T(1,128)}', space=vmem, size = 0x12000, scoped, tag = 'internal scratch']
  #allocation2 [shape = 'f32[2,4]{1,0:T(2,128)}', space=vmem, size = 0x400, scoped, tag = 'scratch operand']
  %s0 = inlined_call_operand.vmem [shape: bf16[2,256,4], index: 0, kind: input, shape index: {}]
  %s1 = inlined_call_operand.vmem [shape: s32[2,16], index: 1, kind: input, shape index: {}]
  %s2 = inlined_call_operand.vmem [shape: f32[4,32], index: 2, kind: input, shape index: {}]
  %s3 = inlined_call_operand.vmem [shape: f32[1,32], index: 3, kind: input, shape index: {}]
  %s4 = inlined_call_operand.hbm [shape: f32[2,16], index: 4, kind: output, shape index: {0}]
  %s5 = inlined_call_operand.hbm [shape: f32[1,8,128], index: 5, kind: output, shape index: {1}]
  %6 = xla_tuple %s4, %s5
  %s7 = sld [smem:[#allocation0]]
  $region42: #{tpu_custom_call.1} parent=0
    _
  %s9 = ssub.s32 1, %s7
  %s10 = scalar_select 0, %s9, %s7
  $region1: #{tpu_custom_call.1} parent=0
    #allocation3 [shape = 'u8[1024]{0}', space=vmem, size = 0x400, scoped, tag = 'output window, operand 0, single buffered']
    #allocation4 [shape = 's32[1]{0}', space=sflag, size = 0x4, scoped, tag = 'scoped memory for tpu_custom_call.1']
    #allocation5 [shape = 'u8[4096]{0}', space=vmem, size = 0x1000, scoped, tag = 'output window, operand 1, single buffered']
    #allocation6 [shape = 's32[1]{0}', space=sflag, size = 0x4, scoped, tag = 'scoped memory for tpu_custom_call.1']
    %11 = vsyncpa [#allocation4], 0
    %12 = vsyncpa [#allocation6], 0
    // Predicated region
    $region2: #{tpu_custom_call.1} parent=1 // pred_check
      _
    $region3: #{tpu_custom_call.1} parent=1 // pred_check_branch
      %14 = sbr.rel (0) target = $region5
    $region4: #{tpu_custom_call.1} parent=1 // pred_region
      _
    $region5: #{tpu_custom_call.1} parent=1 // pred_fallthru
      _
    // Predicated region
    $region6: #{tpu_custom_call.1} parent=1 // pred_check
      _
    $region7: #{tpu_custom_call.1} parent=1 // pred_check_branch
      %16 = sbr.rel (0) target = $region9
    $region8: #{tpu_custom_call.1} parent=1 // pred_region
      _
    $region9: #{tpu_custom_call.1} parent=1 // pred_fallthru
      _
    // Predicated region
    $region10: #{tpu_custom_call.1} parent=1 // pred_check
      _
    $region11: #{tpu_custom_call.1} parent=1 // pred_check_branch
      %18 = sbr.rel (0) target = $region13
    $region12: #{tpu_custom_call.1} parent=1 // pred_region
      _
    $region13: #{tpu_custom_call.1} parent=1 // pred_fallthru
      _
    // Predicated region
    $region14: #{tpu_custom_call.1} parent=1 // pred_check
      _
    $region15: #{tpu_custom_call.1} parent=1 // pred_check_branch
      %20 = sbr.rel (0) target = $region17
    $region16: #{tpu_custom_call.1} parent=1 // pred_region
      _
    $region17: #{tpu_custom_call.1} parent=1 // pred_fallthru
      _
    %p21 = scmp.eq.s32.totalorder 0, 0
    // Predicated region
    $region18: #{tpu_custom_call.1} parent=1 // pred_check
      %p22 = pneg %p21
    $region19: #{tpu_custom_call.1} parent=1 // pred_check_branch
      %24 = sbr.rel (%p22) target = $region21
    $region20: #{tpu_custom_call.1} parent=1 // pred_region
      %vm25 = vcmask 25600
      %26 = vst.msk [vmem:[#allocation2] sm:$0x3] %vm25, 0.0
    $region21: #{tpu_custom_call.1} parent=1 // pred_fallthru
      _
    %v27 = vld [vmem:[%s0] sm:$0xf]
    %v28 = vld [vmem:[%s0 + $0x4] sm:$0xf]
    %v29 = vld [vmem:[%s0 + $0x8] sm:$0xf]
    %v30 = vld [vmem:[%s0 + $0xc] sm:$0xf]
    %v31 = vld [vmem:[%s0 + $0x10] sm:$0xf]
    %v32 = vld [vmem:[%s0 + $0x14] sm:$0xf]
    %v33 = vld [vmem:[%s0 + $0x18] sm:$0xf]
    %v34 = vld [vmem:[%s0 + $0x1c] sm:$0xf]
    %v35 = vld [vmem:[%s0 + $0x20] sm:$0xf]
    %v36 = vld [vmem:[%s0 + $0x24] sm:$0xf]
    %v37 = vld [vmem:[%s0 + $0x28] sm:$0xf]
    %v38 = vld [vmem:[%s0 + $0x2c] sm:$0xf]
    %v39 = vld [vmem:[%s0 + $0x30] sm:$0xf]
    %v40 = vld [vmem:[%s0 + $0x34] sm:$0xf]
    %v41 = vld [vmem:[%s0 + $0x38] sm:$0xf]
    %v42 = vld [vmem:[%s0 + $0x3c] sm:$0xf]
    %v43 = vld [vmem:[%s0 + $0x40] sm:$0xf]
    %v44 = vld [vmem:[%s0 + $0x44] sm:$0xf]
    %v45 = vld [vmem:[%s0 + $0x48] sm:$0xf]
    %v46 = vld [vmem:[%s0 + $0x4c] sm:$0xf]
    %v47 = vld [vmem:[%s0 + $0x50] sm:$0xf]
    %v48 = vld [vmem:[%s0 + $0x54] sm:$0xf]
    %v49 = vld [vmem:[%s0 + $0x58] sm:$0xf]
    %v50 = vld [vmem:[%s0 + $0x5c] sm:$0xf]
    %v51 = vld [vmem:[%s0 + $0x60] sm:$0xf]
    %v52 = vld [vmem:[%s0 + $0x64] sm:$0xf]
    %v53 = vld [vmem:[%s0 + $0x68] sm:$0xf]
    %v54 = vld [vmem:[%s0 + $0x6c] sm:$0xf]
    %v55 = vld [vmem:[%s0 + $0x70] sm:$0xf]
    %v56 = vld [vmem:[%s0 + $0x74] sm:$0xf]
    %v57 = vld [vmem:[%s0 + $0x78] sm:$0xf]
    %v58 = vld [vmem:[%s0 + $0x7c] sm:$0xf]
    %v59 = vld [vmem:[%s0 + $0x80] sm:$0xf]
    %v60 = vld [vmem:[%s0 + $0x84] sm:$0xf]
    %v61 = vld [vmem:[%s0 + $0x88] sm:$0xf]
    %v62 = vld [vmem:[%s0 + $0x8c] sm:$0xf]
    %v63 = vld [vmem:[%s0 + $0x90] sm:$0xf]
    %v64 = vld [vmem:[%s0 + $0x94] sm:$0xf]
    %v65 = vld [vmem:[%s0 + $0x98] sm:$0xf]
    %v66 = vld [vmem:[%s0 + $0x9c] sm:$0xf]
    %v67 = vld [vmem:[%s0 + $0xa0] sm:$0xf]
    %v68 = vld [vmem:[%s0 + $0xa4] sm:$0xf]
    %v69 = vld [vmem:[%s0 + $0xa8] sm:$0xf]
    %v70 = vld [vmem:[%s0 + $0xac] sm:$0xf]
    %v71 = vld [vmem:[%s0 + $0xb0] sm:$0xf]
    %v72 = vld [vmem:[%s0 + $0xb4] sm:$0xf]
    %v73 = vld [vmem:[%s0 + $0xb8] sm:$0xf]
    %v74 = vld [vmem:[%s0 + $0xbc] sm:$0xf]
    %v75 = vld [vmem:[%s0 + $0xc0] sm:$0xf]
    %v76 = vld [vmem:[%s0 + $0xc4] sm:$0xf]
    %v77 = vld [vmem:[%s0 + $0xc8] sm:$0xf]
    %v78 = vld [vmem:[%s0 + $0xcc] sm:$0xf]
    %v79 = vld [vmem:[%s0 + $0xd0] sm:$0xf]
    %v80 = vld [vmem:[%s0 + $0xd4] sm:$0xf]
    %v81 = vld [vmem:[%s0 + $0xd8] sm:$0xf]
    %v82 = vld [vmem:[%s0 + $0xdc] sm:$0xf]
    %v83 = vld [vmem:[%s0 + $0xe0] sm:$0xf]
    %v84 = vld [vmem:[%s0 + $0xe4] sm:$0xf]
    %v85 = vld [vmem:[%s0 + $0xe8] sm:$0xf]
    %v86 = vld [vmem:[%s0 + $0xec] sm:$0xf]
    %v87 = vld [vmem:[%s0 + $0xf0] sm:$0xf]
    %v88 = vld [vmem:[%s0 + $0xf4] sm:$0xf]
    %v89 = vld [vmem:[%s0 + $0xf8] sm:$0xf]
    %v90 = vld [vmem:[%s0 + $0xfc] sm:$0xf]
    %v91 = vunpack.c.l.bf16 %v27
    %v92 = vunpack.c.l.bf16 %v28
    %v93 = vunpack.c.l.bf16 %v29
    %v94 = vunpack.c.l.bf16 %v30
    %v95 = vunpack.c.l.bf16 %v31
    %v96 = vunpack.c.l.bf16 %v32
    %v97 = vunpack.c.l.bf16 %v33
    %v98 = vunpack.c.l.bf16 %v34
    %v99 = vunpack.c.l.bf16 %v35
    %v100 = vunpack.c.l.bf16 %v36
    %v101 = vunpack.c.l.bf16 %v37
    %v102 = vunpack.c.l.bf16 %v38
    %v103 = vunpack.c.l.bf16 %v39
    %v104 = vunpack.c.l.bf16 %v40
    %v105 = vunpack.c.l.bf16 %v41
    %v106 = vunpack.c.l.bf16 %v42
    %v107 = vunpack.c.l.bf16 %v43
    %v108 = vunpack.c.l.bf16 %v44
    %v109 = vunpack.c.l.bf16 %v45
    %v110 = vunpack.c.l.bf16 %v46
    %v111 = vunpack.c.l.bf16 %v47
    %v112 = vunpack.c.l.bf16 %v48
    %v113 = vunpack.c.l.bf16 %v49
    %v114 = vunpack.c.l.bf16 %v50
    %v115 = vunpack.c.l.bf16 %v51
    %v116 = vunpack.c.l.bf16 %v52
    %v117 = vunpack.c.l.bf16 %v53
    %v118 = vunpack.c.l.bf16 %v54
    %v119 = vunpack.c.l.bf16 %v55
    %v120 = vunpack.c.l.bf16 %v56
    %v121 = vunpack.c.l.bf16 %v57
    %v122 = vunpack.c.l.bf16 %v58
    %v123 = vunpack.c.l.bf16 %v59
    %v124 = vunpack.c.l.bf16 %v60
    %v125 = vunpack.c.l.bf16 %v61
    %v126 = vunpack.c.l.bf16 %v62
    %v127 = vunpack.c.l.bf16 %v63
    %v128 = vunpack.c.l.bf16 %v64
    %v129 = vunpack.c.l.bf16 %v65
    %v130 = vunpack.c.l.bf16 %v66
    %v131 = vunpack.c.l.bf16 %v67
    %v132 = vunpack.c.l.bf16 %v68
    %v133 = vunpack.c.l.bf16 %v69
    %v134 = vunpack.c.l.bf16 %v70
    %v135 = vunpack.c.l.bf16 %v71
    %v136 = vunpack.c.l.bf16 %v72
    %v137 = vunpack.c.l.bf16 %v73
    %v138 = vunpack.c.l.bf16 %v74
    %v139 = vunpack.c.l.bf16 %v75
    %v140 = vunpack.c.l.bf16 %v76
    %v141 = vunpack.c.l.bf16 %v77
    %v142 = vunpack.c.l.bf16 %v78
    %v143 = vunpack.c.l.bf16 %v79
    %v144 = vunpack.c.l.bf16 %v80
    %v145 = vunpack.c.l.bf16 %v81
    %v146 = vunpack.c.l.bf16 %v82
    %v147 = vunpack.c.l.bf16 %v83
    %v148 = vunpack.c.l.bf16 %v84
    %v149 = vunpack.c.l.bf16 %v85
    %v150 = vunpack.c.l.bf16 %v86
    %v151 = vunpack.c.l.bf16 %v87
    %v152 = vunpack.c.l.bf16 %v88
    %v153 = vunpack.c.l.bf16 %v89
    %v154 = vunpack.c.l.bf16 %v90
    %v155 = vld [vmem:[#allocation2] sm:$0x3]
    %vm156 = vcmask 31744
    %v157 = vsel %vm156, %v91, 0.0
    %v158 = vsel %vm156, %v92, 0.0
    %v159 = vadd.f32 %v157, %v158
    %v160 = vsel %vm156, %v93, 0.0
    %v161 = vadd.f32 %v159, %v160
    %v162 = vsel %vm156, %v94, 0.0
    %v163 = vadd.f32 %v161, %v162
    %v164 = vsel %vm156, %v95, 0.0
    %v165 = vadd.f32 %v163, %v164
    %v166 = vsel %vm156, %v96, 0.0
    %v167 = vadd.f32 %v165, %v166
    %v168 = vsel %vm156, %v97, 0.0
    %v169 = vadd.f32 %v167, %v168
    %v170 = vsel %vm156, %v98, 0.0
    %v171 = vadd.f32 %v169, %v170
    %v172 = vsel %vm156, %v99, 0.0
    %v173 = vadd.f32 %v171, %v172
    %v174 = vsel %vm156, %v100, 0.0
    %v175 = vadd.f32 %v173, %v174
    %v176 = vsel %vm156, %v101, 0.0
    %v177 = vadd.f32 %v175, %v176
    %v178 = vsel %vm156, %v102, 0.0
    %v179 = vadd.f32 %v177, %v178
    %v180 = vsel %vm156, %v103, 0.0
    %v181 = vadd.f32 %v179, %v180
    %v182 = vsel %vm156, %v104, 0.0
    %v183 = vadd.f32 %v181, %v182
    %v184 = vsel %vm156, %v105, 0.0
    %v185 = vadd.f32 %v183, %v184
    %v186 = vsel %vm156, %v106, 0.0
    %v187 = vadd.f32 %v185, %v186
    %v188 = vsel %vm156, %v107, 0.0
    %v189 = vadd.f32 %v187, %v188
    %v190 = vsel %vm156, %v108, 0.0
    %v191 = vadd.f32 %v189, %v190
    %v192 = vsel %vm156, %v109, 0.0
    %v193 = vadd.f32 %v191, %v192
    %v194 = vsel %vm156, %v110, 0.0
    %v195 = vadd.f32 %v193, %v194
    %v196 = vsel %vm156, %v111, 0.0
    %v197 = vadd.f32 %v195, %v196
    %v198 = vsel %vm156, %v112, 0.0
    %v199 = vadd.f32 %v197, %v198
    %v200 = vsel %vm156, %v113, 0.0
    %v201 = vadd.f32 %v199, %v200
    %v202 = vsel %vm156, %v114, 0.0
    %v203 = vadd.f32 %v201, %v202
    %v204 = vsel %vm156, %v115, 0.0
    %v205 = vadd.f32 %v203, %v204
    %v206 = vsel %vm156, %v116, 0.0
    %v207 = vadd.f32 %v205, %v206
    %v208 = vsel %vm156, %v117, 0.0
    %v209 = vadd.f32 %v207, %v208
    %v210 = vsel %vm156, %v118, 0.0
    %v211 = vadd.f32 %v209, %v210
    %v212 = vsel %vm156, %v119, 0.0
    %v213 = vadd.f32 %v211, %v212
    %v214 = vsel %vm156, %v120, 0.0
    %v215 = vadd.f32 %v213, %v214
    %v216 = vsel %vm156, %v121, 0.0
    %v217 = vadd.f32 %v215, %v216
    %v218 = vsel %vm156, %v122, 0.0
    %v219 = vadd.f32 %v217, %v218
    %v220 = vrot.slane %v219, 4
    %v221 = vadd.f32 %v219, %v220
    %v222 = vrot.slane %v221, 2
    %v223 = vadd.f32 %v221, %v222
    %v224 = vrot.slane %v223, 1
    %v225 = vadd.f32 %v223, %v224
    %v226 = vsel %vm156, %v123, 0.0
    %v227 = vsel %vm156, %v124, 0.0
    %v228 = vadd.f32 %v226, %v227
    %v229 = vsel %vm156, %v125, 0.0
    %v230 = vadd.f32 %v228, %v229
    %v231 = vsel %vm156, %v126, 0.0
    %v232 = vadd.f32 %v230, %v231
    %v233 = vsel %vm156, %v127, 0.0
    %v234 = vadd.f32 %v232, %v233
    %v235 = vsel %vm156, %v128, 0.0
    %v236 = vadd.f32 %v234, %v235
    %v237 = vsel %vm156, %v129, 0.0
    %v238 = vadd.f32 %v236, %v237
    %v239 = vsel %vm156, %v130, 0.0
    %v240 = vadd.f32 %v238, %v239
    %v241 = vsel %vm156, %v131, 0.0
    %v242 = vadd.f32 %v240, %v241
    %v243 = vsel %vm156, %v132, 0.0
    %v244 = vadd.f32 %v242, %v243
    %v245 = vsel %vm156, %v133, 0.0
    %v246 = vadd.f32 %v244, %v245
    %v247 = vsel %vm156, %v134, 0.0
    %v248 = vadd.f32 %v246, %v247
    %v249 = vsel %vm156, %v135, 0.0
    %v250 = vadd.f32 %v248, %v249
    %v251 = vsel %vm156, %v136, 0.0
    %v252 = vadd.f32 %v250, %v251
    %v253 = vsel %vm156, %v137, 0.0
    %v254 = vadd.f32 %v252, %v253
    %v255 = vsel %vm156, %v138, 0.0
    %v256 = vadd.f32 %v254, %v255
    %v257 = vsel %vm156, %v139, 0.0
    %v258 = vadd.f32 %v256, %v257
    %v259 = vsel %vm156, %v140, 0.0
    %v260 = vadd.f32 %v258, %v259
    %v261 = vsel %vm156, %v141, 0.0
    %v262 = vadd.f32 %v260, %v261
    %v263 = vsel %vm156, %v142, 0.0
    %v264 = vadd.f32 %v262, %v263
    %v265 = vsel %vm156, %v143, 0.0
    %v266 = vadd.f32 %v264, %v265
    %v267 = vsel %vm156, %v144, 0.0
    %v268 = vadd.f32 %v266, %v267
    %v269 = vsel %vm156, %v145, 0.0
    %v270 = vadd.f32 %v268, %v269
    %v271 = vsel %vm156, %v146, 0.0
    %v272 = vadd.f32 %v270, %v271
    %v273 = vsel %vm156, %v147, 0.0
    %v274 = vadd.f32 %v272, %v273
    %v275 = vsel %vm156, %v148, 0.0
    %v276 = vadd.f32 %v274, %v275
    %v277 = vsel %vm156, %v149, 0.0
    %v278 = vadd.f32 %v276, %v277
    %v279 = vsel %vm156, %v150, 0.0
    %v280 = vadd.f32 %v278, %v279
    %v281 = vsel %vm156, %v151, 0.0
    %v282 = vadd.f32 %v280, %v281
    %v283 = vsel %vm156, %v152, 0.0
    %v284 = vadd.f32 %v282, %v283
    %v285 = vsel %vm156, %v153, 0.0
    %v286 = vadd.f32 %v284, %v285
    %v287 = vsel %vm156, %v154, 0.0
    %v288 = vadd.f32 %v286, %v287
    %v289 = vrot.slane %v288, 4
    %v290 = vadd.f32 %v288, %v289
    %v291 = vrot.slane %v290, 2
    %v292 = vadd.f32 %v290, %v291
    %v293 = vrot.slane %v292, 1
    %v294 = vadd.f32 %v292, %v293
    %vm297 = vcmask 1041409
    %v298 = vsel %vm297, %v294, %v225
    %v300 = vadd.f32 %v155, %v298
    %vm301 = vcmask 25600
    %302 = vst.msk [vmem:[#allocation2] sm:$0x3] %vm301, %v300
    // Predicated region
    $region22: #{tpu_custom_call.1} parent=1 // pred_check
      %p303 = pneg %p21
    $region23: #{tpu_custom_call.1} parent=1 // pred_check_branch
      %305 = sbr.rel (%p303) target = $region25
    $region24: #{tpu_custom_call.1} parent=1 // pred_region
      %v306 = vld [vmem:[#allocation2] sm:$0x3]
      %v307 = vld [vmem:[%s2] sm:$0xf]
      %v308 = vld [vmem:[%s3] sm:$0x1]
      %v310 = vlaneseq
      %v311 = vshrl.u32 %v310, 7
      %v312 = vsub.s32 0, %v311
      %v313 = vrot.slane %v308, %v312
      %v316 = vsel %vm156, %v306, 0
      %vm318 = vcmask 1043456
      %v320 = vsel %vm318, %v307, 0
      %322 = vmatprep.subr.mxu0 0.0
      %323 = vmatpush1.msra.mxu0 0.0
      %324 = vmatprep.subr.mxu0 0.0
      %325 = vmatpush1.msra.mxu0 0.0
      %326 = vmatprep.subr.mxu0 0.0
      %327 = vmatpush1.msra.mxu0 0.0
      %328 = vmatprep.subr.mxu0 0.0
      %329 = vmatpush1.msra.mxu0 0.0
      %330 = vmatprep.subr.mxu0 0.0
      %331 = vmatpush1.msra.mxu0 0.0
      %332 = vmatprep.subr.mxu0 0.0
      %333 = vmatpush1.msra.mxu0 0.0
      %334 = vmatprep.subr.mxu0 0.0
      %335 = vmatpush1.msra.mxu0 0.0
      %336 = vmatprep.subr.mxu0 0.0
      %337 = vmatpush1.msra.mxu0 0.0
      %338 = vmatprep.subr.mxu0 0.0
      %339 = vmatpush1.msra.mxu0 0.0
      %340 = vmatprep.subr.mxu0 0.0
      %341 = vmatpush1.msra.mxu0 0.0
      %342 = vmatprep.subr.mxu0 0.0
      %343 = vmatpush1.msra.mxu0 0.0
      %344 = vmatprep.subr.mxu0 0.0
      %345 = vmatpush1.msra.mxu0 0.0
      %346 = vmatprep.subr.mxu0 0.0
      %347 = vmatpush1.msra.mxu0 0.0
      %348 = vmatprep.subr.mxu0 0.0
      %349 = vmatpush1.msra.mxu0 0.0
      %350 = vmatprep.subr.mxu0 0.0
      %351 = vmatpush1.msra.mxu0 0.0
      %352 = vmatprep.subr.mxu0 0.0
      %353 = vmatpush1.msra.mxu0 %v320
      %354 = vmatprep.subr.mxu0 0.0
      %355 = vmatpush2.msra.mxu0 0.0
      %356 = vmatprep.subr.mxu0 0.0
      %357 = vmatpush2.msra.mxu0 0.0
      %358 = vmatprep.subr.mxu0 0.0
      %359 = vmatpush2.msra.mxu0 0.0
      %360 = vmatprep.subr.mxu0 0.0
      %361 = vmatpush2.msra.mxu0 0.0
      %362 = vmatprep.subr.mxu0 0.0
      %363 = vmatpush2.msra.mxu0 0.0
      %364 = vmatprep.subr.mxu0 0.0
      %365 = vmatpush2.msra.mxu0 0.0
      %366 = vmatprep.subr.mxu0 0.0
      %367 = vmatpush2.msra.mxu0 0.0
      %368 = vmatprep.subr.mxu0 0.0
      %369 = vmatpush2.msra.mxu0 0.0
      %370 = vmatprep.subr.mxu0 0.0
      %371 = vmatpush2.msra.mxu0 0.0
      %372 = vmatprep.subr.mxu0 0.0
      %373 = vmatpush2.msra.mxu0 0.0
      %374 = vmatprep.subr.mxu0 0.0
      %375 = vmatpush2.msra.mxu0 0.0
      %376 = vmatprep.subr.mxu0 0.0
      %377 = vmatpush2.msra.mxu0 0.0
      %378 = vmatprep.subr.mxu0 0.0
      %379 = vmatpush2.msra.mxu0 0.0
      %380 = vmatprep.subr.mxu0 0.0
      %381 = vmatpush2.msra.mxu0 0.0
      %382 = vmatprep.subr.mxu0 0.0
      %383 = vmatpush2.msra.mxu0 0.0
      %384 = vmatprep.subr.mxu0 0.0
      %385 = vmatpush2.msra.mxu0 0.0
      %386 = vmatprep.mubr.f32.mxu0 0.0
      %387 = vmatmul.mubr.f32.gmra.mxu0 %v316
      %v388 = vpop.f32.mrf.mxu0
      %v389 = vadd.f32 %v313, %v388
      %v390 = vpop.f32.mrf.mxu0
      %391 = vdwg.mxu0
      %vm392 = vcmask 123904
      %393 = vst.msk [vmem:[#allocation3] sm:$0x3] %vm392, %v389
      %v394 = vld [vmem:[%s1] sm:$0x3]
      %vm395 = vcmp.gt.s32.totalorder %v394, 0
      %vm396 = vmxor %vm395, 1
      %v397 = vmul.f32 %v389, 0.33333334
      %399 = vrot.lane.b32.xlu0 %v397, 16
      %v400 = vpop.permute.xlu0 %399
      %v402 = vsub.f32 %v397, %v400
      %v403 = vsel %vm392, %v397, -inf
      %404 = vmax.xlane.f32.xlu0 %v403
      %v405 = vpop.xlane.xlu0 %404
      %vm406 = vcmask 255104
      %v407 = vsel %vm406, %v397, -inf
      %408 = vmax.xlane.f32.xlu0 %v407
      %v409 = vpop.xlane.xlu0 %408
      %v410 = vsub.f32 %v397, %v405
      %v411 = vmul.f32 %v410, 1.442695
      %v412 = vpow.pop %v411
      %v413 = vsub.f32 %v397, %v409
      %v414 = vmul.f32 %v413, 1.442695
      %v415 = vpow.pop %v414
      %v416 = vmul.f32 %v415, %v402
      %v417 = vsel %vm396, %v412, 0.0
      %v418 = vsel %vm392, %v417, 0.0
      %419 = vadd.xlane.f32.xlu0 %v418
      %v420 = vpop.xlane.xlu0 %419
      %422 = vrot.lane.b32.xlu0 %v415, 112
      %v423 = vpop.permute.xlu0 %422
      %v425 = vsel %vm396, %v423, 0.0
      %v426 = vsel %vm392, %v425, 0.0
      %427 = vadd.xlane.f32.xlu0 %v426
      %v428 = vpop.xlane.xlu0 %427
      %430 = vrot.lane.b32.xlu0 %v416, 112
      %v431 = vpop.permute.xlu0 %430
      %v433 = vsel %vm396, %v431, 0.0
      %v434 = vsel %vm392, %v433, 0.0
      %435 = vadd.xlane.f32.xlu0 %v434
      %v436 = vpop.xlane.xlu0 %435
      %v437 = vadd.f32 %v420, %v412
      %v438 = vadd.f32 %v428, %v415
      %v439 = vadd.f32 %v436, %v416
      %v440 = vrcp.pop %v438
      %v441 = vmul.f32 %v439, %v440
      %v442 = vlog2.pop %v437
      %v443 = vmul.f32 %v442, 0.6931472
      %v444 = vadd.f32 %v405, %v443
      %446 = vrot.lane.b32.xlu0 %v444, 16
      %v447 = vpop.permute.xlu0 %446
      %v449 = vadd.f32 %v441, %v447
      %v450 = vlog2.pop %v438
      %v451 = vmul.f32 %v450, 0.6931472
      %v452 = vadd.f32 %v409, %v451
      %v453 = vsub.f32 %v449, %v452
      %v454 = vmul.f32 %v453, 9.0
      %v455 = vsel %vm395, 1.0, 0.0
      %v456 = vsel %vm392, %v455, 0.0
      %457 = vadd.xlane.f32.xlu0 %v456
      %v458 = vpop.xlane.xlu0 %457
      %460 = vrot.lane.b32.xlu0 %v454, 112
      %v461 = vpop.permute.xlu0 %460
      %v463 = vsel %vm395, %v461, 0.0
      %v464 = vsel %vm392, %v463, 0.0
      %465 = vadd.xlane.f32.xlu0 %v464
      %v466 = vpop.xlane.xlu0 %465
      %v467 = vmax.f32 %v458, 1.0
      %v468 = vrcp.pop %v467
      %v469 = vmul.f32 %v466, %v468
      %vm470 = vcmask 1024
      %v471 = vsel %vm470, %v469, 0.0
      %472 = vadd.xlane.f32.xlu0 %v471
      %v473 = vpop.xlane.xlu0 %472
      %v474 = vrot.slane %v473, 4
      %v475 = vadd.f32 %v473, %v474
      %v476 = vrot.slane %v475, 2
      %v477 = vadd.f32 %v475, %v476
      %v478 = vrot.slane %v477, 1
      %v479 = vadd.f32 %v477, %v478
      %s480 = vtos %v479
      %v481 = vand.u32 2147483647, %v397
      %v482 = vsub.f32 0.0, %v481
      %v483 = vmul.f32 %v482, 1.442695
      %v484 = vpow.pop %v483
      %v485 = vmax.f32 %v397, 0.0
      %v486 = vadd.f32 %v484, 1.0
      %v487 = vlog2.pop %v486
      %v488 = vmul.f32 %v487, 0.6931472
      %v489 = vadd.f32 %v485, %v488
      %vm490 = vcmp.ge.f32.partialorder %v397, 0.0
      %v491 = vsel %vm490, 1.0, %v484
      %v492 = vrcp.pop %v486
      %v493 = vmul.f32 %v491, %v492
      %495 = vrot.lane.b32.xlu0 %v489, 112
      %v496 = vpop.permute.xlu0 %495
      %v498 = vsub.f32 %v489, %v496
      %v499 = vmul.f32 %v493, %v402
      %501 = vrot.lane.b32.xlu0 %v499, 112
      %v502 = vpop.permute.xlu0 %501
      %v504 = vadd.f32 %v498, %v502
      %v505 = vsel %vm392, %v504, 0.0
      %506 = vadd.xlane.f32.xlu0 %v505
      %v507 = vpop.xlane.xlu0 %506
      %v508 = vrot.slane %v507, 4
      %v509 = vadd.f32 %v507, %v508
      %v510 = vrot.slane %v509, 2
      %v511 = vadd.f32 %v509, %v510
      %v512 = vrot.slane %v511, 1
      %v513 = vadd.f32 %v511, %v512
      %s514 = vtos %v513
      %s515 = smul.f32 %s514, 9.0
      %v516 = vrcp.pop 16.0
      %s517 = vtos %v516
      %s518 = smul.f32 %s515, %s517
      %s519 = smul.f32 %s480, 0.5
      %s520 = smul.f32 %s518, 0.5
      %s521 = sadd.f32 %s519, %s520
      %v522 = vstv %s521
      %523 = vst [vmem:[#allocation5] sm:$0xff] %v522
    $region25: #{tpu_custom_call.1} parent=1 // pred_fallthru
      _
    // Predicated region
    $region26: #{tpu_custom_call.1} parent=1 // pred_check
      _
    $region27: #{tpu_custom_call.1} parent=1 // pred_check_branch
      %525 = sbr.rel (0) target = $region29
    $region28: #{tpu_custom_call.1} parent=1 // pred_region
      %s527 = ssub.s32 32, 32
      %528 = vsyncadd [#allocation4], %s527
      %s530 = sshll.u32 [#allocation3], 4
      %s531 = int_to_ptr.vmem [resolvable:$true] %s530
      %533 = dma.vmem_to_hbm [thread:$0]  %s531, 32, %s4, [#allocation4]
    $region29: #{tpu_custom_call.1} parent=1 // pred_fallthru
      _
    // Predicated region
    $region30: #{tpu_custom_call.1} parent=1 // pred_check
      _
    $region31: #{tpu_custom_call.1} parent=1 // pred_check_branch
      %535 = sbr.rel (0) target = $region33
    $region32: #{tpu_custom_call.1} parent=1 // pred_region
      %s537 = ssub.s32 128, 128
      %538 = vsyncadd [#allocation6], %s537
      %s540 = sshll.u32 [#allocation5], 4
      %s541 = int_to_ptr.vmem [resolvable:$true] %s540
      %543 = dma.vmem_to_hbm [thread:$0]  %s541, 128, %s5, [#allocation6]
    $region33: #{tpu_custom_call.1} parent=1 // pred_fallthru
      _
    // Predicated region
    $region34: #{tpu_custom_call.1} parent=1 // pred_check
      _
    $region35: #{tpu_custom_call.1} parent=1 // pred_check_branch
      %545 = sbr.rel (0) target = $region37
    $region36: #{tpu_custom_call.1} parent=1 // pred_region
      %546 = dma.done [#allocation4], 32
    $region37: #{tpu_custom_call.1} parent=1 // pred_fallthru
      _
    // Predicated region
    $region38: #{tpu_custom_call.1} parent=1 // pred_check
      _
    $region39: #{tpu_custom_call.1} parent=1 // pred_check_branch
      %548 = sbr.rel (0) target = $region41
    $region40: #{tpu_custom_call.1} parent=1 // pred_region
      %549 = dma.done [#allocation6], 128
    $region41: #{tpu_custom_call.1} parent=1 // pred_fallthru
      _
    %550 = vsyncpa [#allocation4], 1
    %551 = vsyncpa [#allocation6], 1

</llo_original>
